<compile_context>
chip_gen: v5e
topology: v5e:2x2
jax: 0.10.0
libtpu: 0.0.40
codegen_flags: <defaults>
</compile_context>

<pallas_src>
import functools

import jax
import jax.numpy as jnp
from jax.experimental import pallas as pl
from jax.experimental.pallas import tpu as pltpu


def _round_up(v, m):
    return (v + m - 1) // m * m


def _gcn_kernel(adj_ref, sup_ref, dinv_i_ref, b_ref, out_ref, acc_ref, *,
                tile_k, support_resident):
    """One (row-tile i, k-tile) step of out = D^-1/2 (A (D^-1/2 S)) + b."""
    k = pl.program_id(1)

    @pl.when(k == 0)
    def _():
        acc_ref[...] = jnp.zeros_like(acc_ref)

    if support_resident:
        # Whole (pre-scaled) support matrix is VMEM-resident; slice this k tile.
        off = pl.multiple_of(k * tile_k, tile_k)
        sup = sup_ref[pl.ds(off, tile_k), :]
    else:
        sup = sup_ref[...]

    # adj arrives as bf16 (exact 0/1); upcast on the VPU, accumulate in f32.
    acc_ref[...] += jnp.dot(adj_ref[...].astype(jnp.float32), sup,
                            preferred_element_type=jnp.float32)

    @pl.when(k == pl.num_programs(1) - 1)
    def _():
        # Row-side D^-1/2 plus bias, written once per row tile (lane-dense).
        out_ref[...] = (dinv_i_ref[...] * acc_ref[...]
                        + b_ref[...]).astype(out_ref.dtype)


def gcn_conv(x, edge_index, weight, bias, *, tile_m=512, tile_k=512):
    """GCNConv.forward: x [N, F_in] f32, edge_index [2, E] int32."""
    n = x.shape[0]
    f_out = weight.shape[1]

    # --- glue: dense symmetric adjacency from edge_index --------------------
    # Single scatter over concatenated (fwd + reverse) indices, built directly
    # in bf16 (0/1 values are lossless in bf16).
    rows = jnp.concatenate([edge_index[0], edge_index[1]])
    cols = jnp.concatenate([edge_index[1], edge_index[0]])
    adj = jnp.zeros((n, n), jnp.bfloat16).at[rows, cols].set(1.0)
    # TODO(synk): for large sparse graphs replace the dense adj with a
    # CSR/scalar-prefetch formulation (O(E) HBM traffic instead of O(N^2)).

    # Degree (row sum accumulated in f32) + symmetric-normalization factors.
    deg = jnp.sum(adj, axis=1, dtype=jnp.float32)
    # deg == 0 (isolated / padded nodes) -> dinv = 0 so those rows/cols
    # contribute exactly zero instead of inf/NaN poisoning the k reduction.
    # (The original torch module would produce all-NaN output in that case.)
    dinv = jnp.where(deg > 0, jax.lax.rsqrt(deg), 0.0)

    # Hoisted tiny matmul (badly MXU-shaped) + column-side D^-1/2, done once.
    support = jnp.dot(x, weight, precision=jax.lax.Precision.HIGHEST)
    support = support * dinv[:, None]

    # --- adaptive padding / tiling -------------------------------------------
    # Feature dim: 128 lanes minimum; multiples of 256 once past 128 so the
    # MXU N dim stays full width on v6e/v7x.
    f_pad = 128 if f_out <= 128 else _round_up(f_out, 256)

    # Row tiles: multiple of 16 (bf16 sublane tile for the adj block), clamped
    # to the problem size; keep the per-tile f32 accumulator modest so the
    # working set also fits v7x's smaller VMEM for wide feature dims.
    tile_m = min(tile_m, _round_up(n, 16))
    max_acc_bytes = 8 << 20
    if tile_m * f_pad * 4 > max_acc_bytes:
        tile_m = max(16, (max_acc_bytes // (f_pad * 4)) // 16 * 16)
    # Keep >= 2 row tiles when possible so v7x's second TensorCore has work.
    if n >= 32 and _round_up(n, tile_m) // tile_m < 2:
        tile_m = _round_up((n + 1) // 2, 16)
    n_pad_m = _round_up(n, tile_m)

    # Contraction tiles: multiple of 128 lanes, clamped to the problem size.
    tile_k = min(tile_k, _round_up(n, 128))
    n_pad_k = _round_up(n, tile_k)

    grid = (n_pad_m // tile_m, n_pad_k // tile_k)

    # Keep the whole D^-1/2-scaled support matrix resident in VMEM when small:
    # it then gets DMA'd once instead of once per row tile.
    support_resident = n_pad_k * f_pad * 4 <= (6 << 20)

    # --- pad operands (adj rows and cols padded independently) --------------
    adj_p = jnp.pad(adj, ((0, n_pad_m - n), (0, n_pad_k - n)))
    sup_p = jnp.pad(support, ((0, n_pad_k - n), (0, f_pad - f_out)))
    bias_p = jnp.pad(bias, (0, f_pad - f_out)).reshape(1, f_pad)
    dinv_p = jnp.pad(dinv.reshape(n, 1), ((0, n_pad_m - n), (0, 0)))

    if support_resident:
        sup_spec = pl.BlockSpec((n_pad_k, f_pad), lambda i, k: (0, 0))
    else:
        sup_spec = pl.BlockSpec((tile_k, f_pad), lambda i, k: (k, 0))

    grid_spec = pltpu.PrefetchScalarGridSpec(
        num_scalar_prefetch=0,
        grid=grid,
        in_specs=[
            pl.BlockSpec((tile_m, tile_k), lambda i, k: (i, k)),  # adj (bf16)
            sup_spec,                                             # support f32
            pl.BlockSpec((tile_m, 1), lambda i, k: (i, 0)),       # dinv (rows)
            pl.BlockSpec((1, f_pad), lambda i, k: (0, 0)),        # bias
        ],
        out_specs=pl.BlockSpec((tile_m, f_pad), lambda i, k: (i, 0)),
        scratch_shapes=[pltpu.VMEM((tile_m, f_pad), jnp.float32)],
    )

    # VMEM budget: double-buffered adj + support buffers + out + accumulator.
    sup_rows = n_pad_k if support_resident else tile_k
    vmem_bytes = (2 * tile_m * tile_k * 2          # adj double buffer (bf16)
                  + 2 * sup_rows * f_pad * 4       # support buffers (f32)
                  + 2 * tile_m * f_pad * 4         # output double buffer
                  + tile_m * f_pad * 4             # f32 accumulator scratch
                  + (1 << 20))                     # dinv / bias / misc slack
    vmem_limit = int(min(max(vmem_bytes, 32 << 20), 56 << 20))

    sup_reads = 1 if support_resident else grid[0]
    cost = pl.CostEstimate(
        flops=2 * n_pad_m * n_pad_k * f_pad,
        transcendentals=0,
        bytes_accessed=(2 * n_pad_m * n_pad_k                 # adj (bf16)
                        + 4 * sup_reads * n_pad_k * f_pad     # support reads
                        + 4 * n_pad_m * f_pad                 # output write
                        + 4 * (n_pad_m + f_pad)),             # dinv + bias
    )

    kernel = functools.partial(_gcn_kernel, tile_k=tile_k,
                               support_resident=support_resident)

    out_p = pl.pallas_call(
        kernel,
        out_shape=jax.ShapeDtypeStruct((n_pad_m, f_pad), jnp.float32),
        grid_spec=grid_spec,
        compiler_params=pltpu.CompilerParams(
            dimension_semantics=("parallel", "arbitrary"),
            vmem_limit_bytes=vmem_limit),
        cost_estimate=cost,
    )(adj_p, sup_p, dinv_p, bias_p)

    return out_p[:n, :f_out]


def _xavier_uniform(key, fan_in, fan_out):
    bound = (6.0 / (fan_in + fan_out)) ** 0.5
    return jax.random.uniform(key, (fan_in, fan_out), jnp.float32,
                              minval=-bound, maxval=bound)


if __name__ == "__main__":
    num_nodes = 16
    in_features = 8
    out_features = 32

    key = jax.random.PRNGKey(0)
    k_x, k_w, k_e = jax.random.split(key, 3)

    # Node features.
    x = jax.random.normal(k_x, (num_nodes, in_features), jnp.float32)

    # Deterministic edges: a ring (every node has degree >= 1) plus a few
    # extra random edges.
    ring_src = jnp.arange(num_nodes, dtype=jnp.int32)
    ring_dst = (ring_src + 1) % num_nodes
    extra_src = jax.random.randint(k_e, (8,), 0, num_nodes, dtype=jnp.int32)
    extra_dst = (extra_src + 3) % num_nodes
    edge_index = jnp.stack([
        jnp.concatenate([ring_src, extra_src]),
        jnp.concatenate([ring_dst, extra_dst]),
    ])  # (2, 24)

    # Parameters (xavier_uniform weight, zero bias) — deterministic.
    weight = _xavier_uniform(k_w, in_features, out_features)
    bias = jnp.zeros((out_features,), jnp.float32)

    out = gcn_conv(x, edge_index, weight, bias)
    jax.block_until_ready(out)

    # Pure-JAX reference check (same math as the PyTorch forward).
    adj = jnp.zeros((num_nodes, num_nodes), jnp.float32)
    adj = adj.at[edge_index[0], edge_index[1]].set(1.0)
    adj = adj.at[edge_index[1], edge_index[0]].set(1.0)
    deg = jnp.sum(adj, axis=1)
    dinv = 1.0 / jnp.sqrt(deg)
    norm_adj = adj * dinv[:, None] * dinv[None, :]
    supp = jnp.dot(x, weight, precision=jax.lax.Precision.HIGHEST)
    ref = jnp.dot(norm_adj, supp, precision=jax.lax.Precision.HIGHEST) + bias

    assert out.shape == ref.shape, (out.shape, ref.shape)
    assert jnp.allclose(out, ref, atol=1e-4, rtol=1e-4), "mismatch vs reference"

    print("KERNEL_OK")
</pallas_src>

<mosaic_0001>
module attributes {stable_mosaic.version = 11 : i64} {
  func.func @_gcn_kernel(%arg0: i32, %arg1: i32, %arg2: memref<16x128xbf16, #tpu.memory_space<vmem>>, %arg3: memref<128x128xf32, #tpu.memory_space<vmem>>, %arg4: memref<16x1xf32, #tpu.memory_space<vmem>>, %arg5: memref<1x128xf32, #tpu.memory_space<vmem>>, %arg6: memref<16x128xf32, #tpu.memory_space<vmem>>, %arg7: memref<16x128xf32, #tpu.memory_space<vmem>>) attributes {dimension_semantics = [#tpu.dimension_semantics<parallel>, #tpu.dimension_semantics<arbitrary>], iteration_bounds = array<i64: 1, 1>, scalar_prefetch = 0 : i64, scratch_operands = 1 : i64, tpu.core_type = #tpu.core_type<tc>, window_params = [{transform_indices = @transform_0, window_bounds = array<i64: 16, 128>}, {pipeline_mode = #tpu.pipeline_mode<synchronous>, transform_indices = @transform_1, window_bounds = array<i64: 128, 128>}, {transform_indices = @transform_2, window_bounds = array<i64: 16, 1>}, {pipeline_mode = #tpu.pipeline_mode<synchronous>, transform_indices = @transform_3, window_bounds = array<i64: 1, 128>}, {transform_indices = @transform_4, window_bounds = array<i64: 16, 128>}]} {
    %c0_i32 = arith.constant 0 : i32
    %0 = arith.cmpi eq, %arg1, %c0_i32 : i32
    %1 = arith.extui %0 : i1 to i32
    %c0_i32_0 = arith.constant 0 : i32
    %2 = arith.cmpi ne, %1, %c0_i32_0 : i32
    scf.if %2 {
      %cst_9 = arith.constant 0.000000e+00 : f32
      %16 = vector.broadcast %cst_9 : f32 to vector<16x128xf32>
      %c0_10 = arith.constant 0 : index
      %c0_11 = arith.constant 0 : index
      %17 = vector.load %arg7[%c0_10, %c0_11] : memref<16x128xf32, #tpu.memory_space<vmem>>, vector<16x128xf32>
      tpu.vector_store %arg7[%c0_10, %c0_11], %16 {strides = array<i32>} : memref<16x128xf32, #tpu.memory_space<vmem>>, vector<16x128xf32>,
    } else {
    }
    %c128_i32 = arith.constant 128 : i32
    %3 = arith.muli %arg1, %c128_i32 : i32
    %4 = tpu.assume_multiple %3, 128 : i32
    %5 = arith.index_cast %4 : i32 to index
    %c0 = arith.constant 0 : index
    %6 = vector.load %arg3[%5, %c0] : memref<128x128xf32, #tpu.memory_space<vmem>>, vector<128x128xf32>
    %c0_1 = arith.constant 0 : index
    %c0_2 = arith.constant 0 : index
    %7 = vector.load %arg7[%c0_1, %c0_2] : memref<16x128xf32, #tpu.memory_space<vmem>>, vector<16x128xf32>
    %c0_3 = arith.constant 0 : index
    %c0_4 = arith.constant 0 : index
    %8 = vector.load %arg2[%c0_3, %c0_4] : memref<16x128xbf16, #tpu.memory_space<vmem>>, vector<16x128xbf16>
    %9 = arith.extf %8 : vector<16x128xbf16> to vector<16x128xf32>
    %cst = arith.constant dense<0.000000e+00> : vector<16x128xf32>
    %10 = tpu.matmul %9, %6, %cst {dimension_numbers = #tpu.dot_dimension_numbers<[1], [0], [0], [1], [0, 0, 1, 1], [], []>} : vector<16x128xf32>, vector<128x128xf32>, vector<16x128xf32> -> vector<16x128xf32>
    %11 = arith.addf %7, %10 : vector<16x128xf32>
    %c0_5 = arith.constant 0 : index
    %c0_6 = arith.constant 0 : index
    %12 = vector.load %arg7[%c0_5, %c0_6] : memref<16x128xf32, #tpu.memory_space<vmem>>, vector<16x128xf32>
    tpu.vector_store %arg7[%c0_5, %c0_6], %11 {strides = array<i32>} : memref<16x128xf32, #tpu.memory_space<vmem>>, vector<16x128xf32>,
    %c0_i32_7 = arith.constant 0 : i32
    %13 = arith.cmpi eq, %arg1, %c0_i32_7 : i32
    %14 = arith.extui %13 : i1 to i32
    %c0_i32_8 = arith.constant 0 : i32
    %15 = arith.cmpi ne, %14, %c0_i32_8 : i32
    scf.if %15 {
      %c0_9 = arith.constant 0 : index
      %c0_10 = arith.constant 0 : index
      %16 = vector.load %arg4[%c0_9, %c0_10] : memref<16x1xf32, #tpu.memory_space<vmem>>, vector<16x1xf32>
      %c0_11 = arith.constant 0 : index
      %c0_12 = arith.constant 0 : index
      %17 = vector.load %arg7[%c0_11, %c0_12] : memref<16x128xf32, #tpu.memory_space<vmem>>, vector<16x128xf32>
      %18 = vector.broadcast %16 : vector<16x1xf32> to vector<16x128xf32>
      %19 = arith.mulf %18, %17 : vector<16x128xf32>
      %c0_13 = arith.constant 0 : index
      %c0_14 = arith.constant 0 : index
      %20 = vector.load %arg5[%c0_13, %c0_14] : memref<1x128xf32, #tpu.memory_space<vmem>>, vector<1x128xf32>
      %21 = vector.broadcast %20 : vector<1x128xf32> to vector<16x128xf32>
      %22 = arith.addf %19, %21 : vector<16x128xf32>
      %c0_15 = arith.constant 0 : index
      %c0_16 = arith.constant 0 : index
      %23 = vector.load %arg6[%c0_15, %c0_16] : memref<16x128xf32, #tpu.memory_space<vmem>>, vector<16x128xf32>
      tpu.vector_store %arg6[%c0_15, %c0_16], %22 {strides = array<i32>} : memref<16x128xf32, #tpu.memory_space<vmem>>, vector<16x128xf32>,
    } else {
    }
    return
  }
  func.func @transform_0(%arg0: i32, %arg1: i32) -> (i32, i32) {
    %c0_i32 = arith.constant 0 : i32
    return %arg0, %arg1 : i32, i32
  }
  func.func @transform_1(%arg0: i32, %arg1: i32) -> (i32, i32) {
    %c0_i32 = arith.constant 0 : i32
    %c0_i32_0 = arith.constant 0 : i32
    %c0_i32_1 = arith.constant 0 : i32
    return %c0_i32, %c0_i32_0 : i32, i32
  }
  func.func @transform_2(%arg0: i32, %arg1: i32) -> (i32, i32) {
    %c0_i32 = arith.constant 0 : i32
    %c0_i32_0 = arith.constant 0 : i32
    return %arg0, %c0_i32 : i32, i32
  }
  func.func @transform_3(%arg0: i32, %arg1: i32) -> (i32, i32) {
    %c0_i32 = arith.constant 0 : i32
    %c0_i32_0 = arith.constant 0 : i32
    %c0_i32_1 = arith.constant 0 : i32
    return %c0_i32, %c0_i32_0 : i32, i32
  }
  func.func @transform_4(%arg0: i32, %arg1: i32) -> (i32, i32) {
    %c0_i32 = arith.constant 0 : i32
    %c0_i32_0 = arith.constant 0 : i32
    return %arg0, %c0_i32 : i32, i32
  }
}

</mosaic_0001>

<llo_original>
// kernel: tpu_custom_call.1
$region0: #{tpu_custom_call.1}
  #allocation0 [shape = 'u32[]', space=smem, size = 0x4, offset = 0x4, fixed_abs, tag = 'smem constant byte address 0x4 - core index']
  #allocation1 [shape = 'u32[72,128]{1,0:T(1,128)}', space=vmem, size = 0x9000, scoped, tag = 'internal scratch']
  #allocation2 [shape = 'f32[16,128]{1,0:T(8,128)}', space=vmem, size = 0x2000, scoped, tag = 'scratch operand']
  %s0 = inlined_call_operand.vmem [shape: bf16[16,128], index: 0, kind: input, shape index: {}]
  %s1 = inlined_call_operand.hbm [shape: f32[128,128], index: 1, kind: input, shape index: {}]
  %s2 = inlined_call_operand.vmem [shape: f32[16,1], index: 2, kind: input, shape index: {}]
  %s3 = inlined_call_operand.vmem [shape: f32[1,128], index: 3, kind: input, shape index: {}]
  %s4 = inlined_call_operand.hbm [shape: f32[16,128], index: 4, kind: output, shape index: {}]
  %s5 = sld [smem:[#allocation0]]
  $region38: #{tpu_custom_call.1} parent=0
    _
  %s7 = ssub.s32 1, %s5
  %s8 = scalar_select 0, %s7, %s5
  $region1: #{tpu_custom_call.1} parent=0
    #allocation3 [shape = 'u8[65536]{0}', space=vmem, size = 0x10000, scoped, tag = 'input window, operand 1, single buffered']
    #allocation4 [shape = 's32[1]{0}', space=sflag, size = 0x4, scoped, tag = 'scoped memory for tpu_custom_call.1']
    #allocation5 [shape = 's32[1]{0}', space=sflag, size = 0x4, scoped, tag = 'scoped memory for tpu_custom_call.1']
    #allocation6 [shape = 'u8[8192]{0}', space=vmem, size = 0x2000, scoped, tag = 'output window, operand 0, single buffered']
    %9 = vsyncpa [#allocation4], 0
    %10 = vsyncpa [#allocation5], 0
    // Predicated region
    $region2: #{tpu_custom_call.1} parent=1 // pred_check
      _
    $region3: #{tpu_custom_call.1} parent=1 // pred_check_branch
      %12 = sbr.rel (0) target = $region5
    $region4: #{tpu_custom_call.1} parent=1 // pred_region
      _
    $region5: #{tpu_custom_call.1} parent=1 // pred_fallthru
      _
    // Predicated region
    $region6: #{tpu_custom_call.1} parent=1 // pred_check
      _
    $region7: #{tpu_custom_call.1} parent=1 // pred_check_branch
      %14 = sbr.rel (0) target = $region9
    $region8: #{tpu_custom_call.1} parent=1 // pred_region
      %16 = vsyncadd [#allocation4], 0
      %s17 = sshll.u32 %s1, 4
      %s18 = int_to_ptr.hbm [resolvable:$true] %s17
      %s19 = sshll.u32 [#allocation3], 4
      %s20 = int_to_ptr.vmem [resolvable:$true] %s19
      %25 = dma.hbm_to_vmem [thread:$0]  %s18, 2048, %s20, [#allocation4], 128, 128, 8
    $region9: #{tpu_custom_call.1} parent=1 // pred_fallthru
      _
    // Predicated region
    $region10: #{tpu_custom_call.1} parent=1 // pred_check
      _
    $region11: #{tpu_custom_call.1} parent=1 // pred_check_branch
      %27 = sbr.rel (0) target = $region13
    $region12: #{tpu_custom_call.1} parent=1 // pred_region
      _
    $region13: #{tpu_custom_call.1} parent=1 // pred_fallthru
      _
    // Predicated region
    $region14: #{tpu_custom_call.1} parent=1 // pred_check
      _
    $region15: #{tpu_custom_call.1} parent=1 // pred_check_branch
      %29 = sbr.rel (0) target = $region17
    $region16: #{tpu_custom_call.1} parent=1 // pred_region
      _
    $region17: #{tpu_custom_call.1} parent=1 // pred_fallthru
      _
    // Predicated region
    $region18: #{tpu_custom_call.1} parent=1 // pred_check
      _
    $region19: #{tpu_custom_call.1} parent=1 // pred_check_branch
      %31 = sbr.rel (0) target = $region21
    $region20: #{tpu_custom_call.1} parent=1 // pred_region
      %33 = dma.done [#allocation4], 2048
    $region21: #{tpu_custom_call.1} parent=1 // pred_fallthru
      _
    %p34 = scmp.eq.s32.totalorder 0, 0
    // Predicated region
    $region22: #{tpu_custom_call.1} parent=1 // pred_check
      %p35 = pneg %p34
    $region23: #{tpu_custom_call.1} parent=1 // pred_check_branch
      %37 = sbr.rel (%p35) target = $region25
    $region24: #{tpu_custom_call.1} parent=1 // pred_region
      %38 = vst [vmem:[#allocation2] sm:$0xff] 0.0
      %39 = vst [vmem:[#allocation2 + $0x8] sm:$0xff] 0.0
    $region25: #{tpu_custom_call.1} parent=1 // pred_fallthru
      _
    %s40 = smul.u32 0, 128
    %s41 = scalar_lea.vmem [#allocation3], %s40
    %v42 = vld [vmem:[%s41] sm:$0xff]
    %v43 = vld [vmem:[%s41 + $0x8] sm:$0xff]
    %v44 = vld [vmem:[%s41 + $0x10] sm:$0xff]
    %v45 = vld [vmem:[%s41 + $0x18] sm:$0xff]
    %v46 = vld [vmem:[%s41 + $0x20] sm:$0xff]
    %v47 = vld [vmem:[%s41 + $0x28] sm:$0xff]
    %v48 = vld [vmem:[%s41 + $0x30] sm:$0xff]
    %v49 = vld [vmem:[%s41 + $0x38] sm:$0xff]
    %v50 = vld [vmem:[%s41 + $0x40] sm:$0xff]
    %v51 = vld [vmem:[%s41 + $0x48] sm:$0xff]
    %v52 = vld [vmem:[%s41 + $0x50] sm:$0xff]
    %v53 = vld [vmem:[%s41 + $0x58] sm:$0xff]
    %v54 = vld [vmem:[%s41 + $0x60] sm:$0xff]
    %v55 = vld [vmem:[%s41 + $0x68] sm:$0xff]
    %v56 = vld [vmem:[%s41 + $0x70] sm:$0xff]
    %v57 = vld [vmem:[%s41 + $0x78] sm:$0xff]
    %v58 = vld [vmem:[#allocation2] sm:$0xff]
    %v59 = vld [vmem:[#allocation2 + $0x8] sm:$0xff]
    %v60 = vld [vmem:[%s0] sm:$0xf]
    %v61 = vld [vmem:[%s0 + $0x4] sm:$0xf]
    %v62 = vunpack.c.l.bf16 %v60
    %v63 = vunpack.c.l.bf16 %v61
    %64 = vmatpush.msra.mxu0 %v57
    %65 = vmatpush.msra.mxu0 %v56
    %66 = vmatpush.msra.mxu0 %v55
    %67 = vmatpush.msra.mxu0 %v54
    %68 = vmatpush.msra.mxu0 %v53
    %69 = vmatpush.msra.mxu0 %v52
    %70 = vmatpush.msra.mxu0 %v51
    %71 = vmatpush.msra.mxu0 %v50
    %72 = vmatpush.msra.mxu0 %v49
    %73 = vmatpush.msra.mxu0 %v48
    %74 = vmatpush.msra.mxu0 %v47
    %75 = vmatpush.msra.mxu0 %v46
    %76 = vmatpush.msra.mxu0 %v45
    %77 = vmatpush.msra.mxu0 %v44
    %78 = vmatpush.msra.mxu0 %v43
    %79 = vmatpush.msra.mxu0 %v42
    %80 = vmatmul.f32.gmra.mxu0 %v62
    %v81 = vpop.f32.mrf.mxu0
    %v82 = vadd.f32 0.0, %v81
    %83 = vmatmul.f32.gmra.mxu0 %v63
    %v84 = vpop.f32.mrf.mxu0
    %v85 = vadd.f32 0.0, %v84
    %86 = vdwg.mxu0
    %v87 = vadd.f32 %v58, %v82
    %v88 = vadd.f32 %v59, %v85
    %89 = vst [vmem:[#allocation2] sm:$0xff] %v87
    %90 = vst [vmem:[#allocation2 + $0x8] sm:$0xff] %v88
    // Predicated region
    $region26: #{tpu_custom_call.1} parent=1 // pred_check
      %p91 = pneg %p34
    $region27: #{tpu_custom_call.1} parent=1 // pred_check_branch
      %93 = sbr.rel (%p91) target = $region29
    $region28: #{tpu_custom_call.1} parent=1 // pred_region
      %v94 = vld [vmem:[%s2] sm:$0xff]
      %v95 = vld [vmem:[%s2 + $0x8] sm:$0xff]
      %v96 = vld [vmem:[#allocation2] sm:$0xff]
      %v97 = vld [vmem:[#allocation2 + $0x8] sm:$0xff]
      %99 = vset.pattern.permute.xlu0 0
      %100 = vperm.xlu0 %99, %v94
      %v101 = vpop.permute.xlu0 %100
      %104 = vset.pattern.permute.xlu0 0
      %105 = vperm.xlu0 %104, %v95
      %v106 = vpop.permute.xlu0 %105
      %v108 = vmul.f32 %v101, %v96
      %v109 = vmul.f32 %v106, %v97
      %v110 = vld [vmem:[%s3] sm:$0x1]
      %v112 = vperm.slane %v110, 0
      %v114 = vadd.f32 %v108, %v112
      %v115 = vadd.f32 %v109, %v112
      %116 = vst [vmem:[#allocation6] sm:$0xff] %v114
      %117 = vst [vmem:[#allocation6 + $0x8] sm:$0xff] %v115
    $region29: #{tpu_custom_call.1} parent=1 // pred_fallthru
      _
    // Predicated region
    $region30: #{tpu_custom_call.1} parent=1 // pred_check
      _
    $region31: #{tpu_custom_call.1} parent=1 // pred_check_branch
      %119 = sbr.rel (0) target = $region33
    $region32: #{tpu_custom_call.1} parent=1 // pred_region
      %121 = vsyncadd [#allocation5], 0
      %s122 = sshll.u32 [#allocation6], 4
      %s123 = int_to_ptr.vmem [resolvable:$true] %s122
      %s124 = sshll.u32 %s4, 4
      %s125 = int_to_ptr.hbm [resolvable:$true] %s124
      %130 = dma.vmem_to_hbm [thread:$0]  %s123, 256, %s125, [#allocation5], 128, 128, 8
    $region33: #{tpu_custom_call.1} parent=1 // pred_fallthru
      _
    // Predicated region
    $region34: #{tpu_custom_call.1} parent=1 // pred_check
      _
    $region35: #{tpu_custom_call.1} parent=1 // pred_check_branch
      %132 = sbr.rel (0) target = $region37
    $region36: #{tpu_custom_call.1} parent=1 // pred_region
      %134 = dma.done [#allocation5], 256
    $region37: #{tpu_custom_call.1} parent=1 // pred_fallthru
      _
    %135 = vsyncpa [#allocation4], 1
    %136 = vsyncpa [#allocation5], 1

</llo_original>
